<compile_context>
chip_gen: v6e
topology: v6e:2x2x1
jax: 0.10.0
libtpu: 0.0.40
codegen_flags: <defaults>
</compile_context>

<pallas_src>
import functools

import jax
import jax.numpy as jnp
from jax.experimental import pallas as pl
from jax.experimental.pallas import tpu as pltpu

LANE = 128


def _focal_kernel(logit_ref, tgt_ref, alpha_ref, out_ref, *,
                  gamma, smooth, num_class, rows_per_block, total_pixels,
                  needs_mask):
    # logit_ref: (1, C, TR, 128)  float
    # tgt_ref:   (1, 1, TR, 128)  int32
    # alpha_ref: (C,)             float32 in SMEM
    # out_ref:   (1, 1, 8, 128)   float32 per-block, per-lane partial sums
    tgt = tgt_ref[0, 0]                                  # (TR, 128) int32
    tgt = jnp.where(tgt == 225, 0, tgt)                  # mirrors idx[idx == 225] = 0

    low = smooth / (num_class - 1)
    high = 1.0 - smooth

    # Unrolled class loop (C is small): pure VPU, no (M, C) one-hot.
    logit0 = logit_ref[0, 0].astype(jnp.float32)         # (TR, 128)
    row_sum = logit0
    tgt_logit = logit0
    alpha_sel = jnp.full(tgt.shape, alpha_ref[0], jnp.float32)
    for c in range(1, num_class):
        logit_c = logit_ref[0, c].astype(jnp.float32)
        eq_c = tgt == c
        row_sum = row_sum + logit_c
        tgt_logit = jnp.where(eq_c, logit_c, tgt_logit)
        alpha_sel = jnp.where(eq_c, alpha_ref[c], alpha_sel)

    # pt = sum_c clamp(one_hot, low, high) * logit + smooth
    #    = low * row_sum + (high - low) * logit[tgt] + smooth
    pt = low * row_sum + (high - low) * tgt_logit + smooth

    if needs_mask:
        r = pl.program_id(1)
        row_ids = jax.lax.broadcasted_iota(jnp.int32, tgt.shape, 0)
        lane_ids = jax.lax.broadcasted_iota(jnp.int32, tgt.shape, 1)
        pix = (r * rows_per_block + row_ids) * LANE + lane_ids
        valid = pix < total_pixels
        pt = jnp.where(valid, pt, 1.0)                   # log(1)=0, (1-pt)=0 on pads

    logpt = jnp.log(pt)
    one_minus = 1.0 - pt
    g = float(gamma)
    if g == 2.0:
        focal = one_minus * one_minus                    # VPU square, no pow
    elif g == 1.0:
        focal = one_minus
    elif g.is_integer() and g >= 0:
        focal = jax.lax.integer_pow(one_minus, int(g))
    else:
        # TODO(synk): like the PyTorch source, (1 - pt) may be negative for
        # unnormalized inputs, which yields NaN under a non-integer gamma.
        focal = jnp.power(one_minus, g)

    loss = -alpha_sel * focal * logpt                    # (TR, 128)
    if needs_mask:
        loss = jnp.where(valid, loss, 0.0)

    # Reduce rows -> one (8, 128) vreg of per-lane partial sums (VPU adds).
    nrow = loss.shape[0]
    if nrow % 8 == 0:
        part = loss.reshape(nrow // 8, 8, LANE).sum(axis=0)
    else:
        col = jnp.sum(loss, axis=0, keepdims=True)       # (1, 128)
        sub = jax.lax.broadcasted_iota(jnp.int32, (8, LANE), 0)
        part = jnp.where(sub == 0, col, 0.0)
    out_ref[0, 0, :, :] = part


def focal_loss_pallas(logits_nchw, target, alpha, *, gamma=2.0, smooth=1e-5,
                      size_average=True, block_bytes=512 * 1024):
    N, C, H, W = logits_nchw.shape
    P = H * W
    R = -(-P // LANE)                                    # pixel rows of 128

    # Free, contiguous reshapes (no NCHW->NHWC transpose).  Dtype is NOT
    # upcast here: bf16 inputs stay bf16 in HBM and are cast inside the kernel.
    logit3 = logits_nchw.reshape(N, C, P)
    tgt3 = target.reshape(N, 1, P).astype(jnp.int32)
    pad = R * LANE - P
    if pad:
        logit3 = jnp.pad(logit3, ((0, 0), (0, 0), (0, pad)))
        tgt3 = jnp.pad(tgt3, ((0, 0), (0, 0), (0, pad)))
    logit4 = logit3.reshape(N, C, R, LANE)
    tgt4 = tgt3.reshape(N, 1, R, LANE)
    alpha1 = jnp.asarray(alpha, jnp.float32).reshape(C)

    # Row-block size: ~block_bytes of logits per grid step (multiple of 8 rows).
    itemsize = jnp.dtype(logit4.dtype).itemsize
    rows = (block_bytes // (C * LANE * itemsize)) // 8 * 8
    rows = max(8, min(rows, 1024))
    if R <= rows:
        tr, gr = R, 1
    else:
        tr, gr = rows, -(-R // rows)
    needs_mask = (pad != 0) or (gr * tr != R)

    kernel = functools.partial(
        _focal_kernel, gamma=float(gamma), smooth=float(smooth),
        num_class=C, rows_per_block=tr, total_pixels=P, needs_mask=needs_mask)

    partials = pl.pallas_call(
        kernel,
        out_shape=jax.ShapeDtypeStruct((N, gr, 8, LANE), jnp.float32),
        grid_spec=pltpu.PrefetchScalarGridSpec(
            num_scalar_prefetch=0,
            grid=(N, gr),
            in_specs=[
                pl.BlockSpec((1, C, tr, LANE), lambda n, r: (n, 0, r, 0)),
                pl.BlockSpec((1, 1, tr, LANE), lambda n, r: (n, 0, r, 0)),
                pl.BlockSpec(memory_space=pltpu.MemorySpace.SMEM),   # alpha
            ],
            out_specs=pl.BlockSpec((1, 1, 8, LANE), lambda n, r: (n, r, 0, 0)),
        ),
        compiler_params=pltpu.CompilerParams(
            dimension_semantics=("parallel", "parallel")),
    )(logit4, tgt4, alpha1)

    total = jnp.sum(partials)
    M = N * P
    return total / M if size_average else total


def focal_loss_ref(logits_nchw, target, alpha, *, gamma=2.0, smooth=1e-5):
    """Pure-JAX reference mirroring the PyTorch forward (size_average=True)."""
    N, C, H, W = logits_nchw.shape
    logit = jnp.transpose(logits_nchw, (0, 2, 3, 1)).reshape(-1, C).astype(jnp.float32)
    tgt = target.reshape(-1).astype(jnp.int32)
    tgt = jnp.where(tgt == 225, 0, tgt)
    one_hot = jax.nn.one_hot(tgt, C, dtype=jnp.float32)
    one_hot_s = jnp.clip(one_hot, smooth / (C - 1), 1.0 - smooth)
    pt = jnp.sum(one_hot_s * logit, axis=1) + smooth
    logpt = jnp.log(pt)
    alpha_sel = jnp.asarray(alpha, jnp.float32)[tgt]
    loss = -alpha_sel * jnp.power(1.0 - pt, gamma) * logpt
    return jnp.mean(loss)


if __name__ == "__main__":
    key = jax.random.PRNGKey(0)
    k1, k2 = jax.random.split(key)

    N, C, H, W = 2, 4, 16, 16
    # apply_nonlin is None in the module; use probability-like positive inputs
    # so log(pt) is well defined (as the module implicitly assumes).
    logits = jax.random.uniform(k1, (N, C, H, W), jnp.float32,
                                minval=0.05, maxval=1.0)
    target = jax.random.randint(k2, (N, 1, H, W), 0, C, dtype=jnp.int32)

    alpha = [0.1, 0.2, 0.3, 0.4]          # per-class weights (list, as in module)
    gamma, smooth = 2.0, 1e-5

    out = focal_loss_pallas(logits, target, alpha, gamma=gamma, smooth=smooth)
    out = jax.block_until_ready(out)

    ref = focal_loss_ref(logits, target, alpha, gamma=gamma, smooth=smooth)
    assert jnp.allclose(out, ref, rtol=1e-4, atol=1e-6), (out, ref)

    print("KERNEL_OK")
</pallas_src>

<mosaic_0001>
module attributes {stable_mosaic.version = 11 : i64} {
  func.func @_focal_kernel(%arg0: i32, %arg1: i32, %arg2: memref<1x4x2x128xf32, #tpu.memory_space<vmem>>, %arg3: memref<1x1x2x128xi32, #tpu.memory_space<vmem>>, %arg4: memref<4xf32, #tpu.memory_space<smem>>, %arg5: memref<1x1x8x128xf32, #tpu.memory_space<vmem>>) attributes {dimension_semantics = [#tpu.dimension_semantics<parallel>, #tpu.dimension_semantics<parallel>], iteration_bounds = array<i64: 2, 1>, scalar_prefetch = 0 : i64, scratch_operands = 0 : i64, tpu.core_type = #tpu.core_type<tc>, window_params = [{transform_indices = @transform_0, window_bounds = array<i64: 1, 4, 2, 128>}, {transform_indices = @transform_1, window_bounds = array<i64: 1, 1, 2, 128>}, {transform_indices = @transform_2, window_bounds = array<i64: 4>}, {transform_indices = @transform_3, window_bounds = array<i64: 1, 1, 8, 128>}]} {
    %c0 = arith.constant 0 : index
    %c0_0 = arith.constant 0 : index
    %c0_1 = arith.constant 0 : index
    %c0_2 = arith.constant 0 : index
    %0 = vector.load %arg3[%c0, %c0_0, %c0_1, %c0_2] : memref<1x1x2x128xi32, #tpu.memory_space<vmem>>, vector<1x1x2x128xi32>
    %1 = vector.shape_cast %0 : vector<1x1x2x128xi32> to vector<2x128xi32>
    %c225_i32 = arith.constant 225 : i32
    %2 = vector.broadcast %c225_i32 : i32 to vector<2x128xi32>
    %3 = arith.cmpi eq, %1, %2 : vector<2x128xi32>
    %c0_i32 = arith.constant 0 : i32
    %4 = vector.broadcast %c0_i32 : i32 to vector<2x128xi32>
    %5 = arith.select %3, %4, %1 : vector<2x128xi1>, vector<2x128xi32>
    %c0_3 = arith.constant 0 : index
    %c0_4 = arith.constant 0 : index
    %c0_5 = arith.constant 0 : index
    %c0_6 = arith.constant 0 : index
    %6 = vector.load %arg2[%c0_3, %c0_4, %c0_5, %c0_6] : memref<1x4x2x128xf32, #tpu.memory_space<vmem>>, vector<1x1x2x128xf32>
    %7 = vector.shape_cast %6 : vector<1x1x2x128xf32> to vector<2x128xf32>
    %c0_7 = arith.constant 0 : index
    %8 = memref.load %arg4[%c0_7] : memref<4xf32, #tpu.memory_space<smem>>
    %9 = vector.broadcast %8 : f32 to vector<2x128xf32>
    %c0_8 = arith.constant 0 : index
    %c1 = arith.constant 1 : index
    %c0_9 = arith.constant 0 : index
    %c0_10 = arith.constant 0 : index
    %10 = vector.load %arg2[%c0_8, %c1, %c0_9, %c0_10] : memref<1x4x2x128xf32, #tpu.memory_space<vmem>>, vector<1x1x2x128xf32>
    %11 = vector.shape_cast %10 : vector<1x1x2x128xf32> to vector<2x128xf32>
    %c1_i32 = arith.constant 1 : i32
    %12 = vector.broadcast %c1_i32 : i32 to vector<2x128xi32>
    %13 = arith.cmpi eq, %5, %12 : vector<2x128xi32>
    %14 = arith.addf %7, %11 : vector<2x128xf32>
    %15 = arith.select %13, %11, %7 : vector<2x128xi1>, vector<2x128xf32>
    %c1_11 = arith.constant 1 : index
    %16 = memref.load %arg4[%c1_11] : memref<4xf32, #tpu.memory_space<smem>>
    %17 = vector.broadcast %16 : f32 to vector<2x128xf32>
    %18 = arith.select %13, %17, %9 : vector<2x128xi1>, vector<2x128xf32>
    %c0_12 = arith.constant 0 : index
    %c2 = arith.constant 2 : index
    %c0_13 = arith.constant 0 : index
    %c0_14 = arith.constant 0 : index
    %19 = vector.load %arg2[%c0_12, %c2, %c0_13, %c0_14] : memref<1x4x2x128xf32, #tpu.memory_space<vmem>>, vector<1x1x2x128xf32>
    %20 = vector.shape_cast %19 : vector<1x1x2x128xf32> to vector<2x128xf32>
    %c2_i32 = arith.constant 2 : i32
    %21 = vector.broadcast %c2_i32 : i32 to vector<2x128xi32>
    %22 = arith.cmpi eq, %5, %21 : vector<2x128xi32>
    %23 = arith.addf %14, %20 : vector<2x128xf32>
    %24 = arith.select %22, %20, %15 : vector<2x128xi1>, vector<2x128xf32>
    %c2_15 = arith.constant 2 : index
    %25 = memref.load %arg4[%c2_15] : memref<4xf32, #tpu.memory_space<smem>>
    %26 = vector.broadcast %25 : f32 to vector<2x128xf32>
    %27 = arith.select %22, %26, %18 : vector<2x128xi1>, vector<2x128xf32>
    %c0_16 = arith.constant 0 : index
    %c3 = arith.constant 3 : index
    %c0_17 = arith.constant 0 : index
    %c0_18 = arith.constant 0 : index
    %28 = vector.load %arg2[%c0_16, %c3, %c0_17, %c0_18] : memref<1x4x2x128xf32, #tpu.memory_space<vmem>>, vector<1x1x2x128xf32>
    %29 = vector.shape_cast %28 : vector<1x1x2x128xf32> to vector<2x128xf32>
    %c3_i32 = arith.constant 3 : i32
    %30 = vector.broadcast %c3_i32 : i32 to vector<2x128xi32>
    %31 = arith.cmpi eq, %5, %30 : vector<2x128xi32>
    %32 = arith.addf %23, %29 : vector<2x128xf32>
    %33 = arith.select %31, %29, %24 : vector<2x128xi1>, vector<2x128xf32>
    %c3_19 = arith.constant 3 : index
    %34 = memref.load %arg4[%c3_19] : memref<4xf32, #tpu.memory_space<smem>>
    %35 = vector.broadcast %34 : f32 to vector<2x128xf32>
    %36 = arith.select %31, %35, %27 : vector<2x128xi1>, vector<2x128xf32>
    %cst = arith.constant 3.33333332E-6 : f32
    %37 = vector.broadcast %cst : f32 to vector<2x128xf32>
    %38 = arith.mulf %37, %32 : vector<2x128xf32>
    %cst_20 = arith.constant 0.999986648 : f32
    %39 = vector.broadcast %cst_20 : f32 to vector<2x128xf32>
    %40 = arith.mulf %39, %33 : vector<2x128xf32>
    %41 = arith.addf %38, %40 : vector<2x128xf32>
    %cst_21 = arith.constant 9.99999974E-6 : f32
    %42 = vector.broadcast %cst_21 : f32 to vector<2x128xf32>
    %43 = arith.addf %41, %42 : vector<2x128xf32>
    %44 = math.log %43 : vector<2x128xf32>
    %cst_22 = arith.constant 1.000000e+00 : f32
    %45 = vector.broadcast %cst_22 : f32 to vector<2x128xf32>
    %46 = arith.subf %45, %43 : vector<2x128xf32>
    %47 = arith.mulf %46, %46 : vector<2x128xf32>
    %cst_23 = arith.constant 0.000000e+00 : f32
    %48 = vector.broadcast %cst_23 : f32 to vector<2x128xf32>
    %49 = arith.subf %48, %36 : vector<2x128xf32>
    %50 = arith.mulf %49, %47 : vector<2x128xf32>
    %51 = arith.mulf %50, %44 : vector<2x128xf32>
    %cst_24 = arith.constant dense<0.000000e+00> : vector<128xf32>
    %52 = vector.multi_reduction <add>, %51, %cst_24 [0] : vector<2x128xf32> to vector<128xf32>
    %53 = vector.shape_cast %52 : vector<128xf32> to vector<1x128xf32>
    %54 = tpu.iota {dimensions = array<i32: 0>} : vector<8x128xi32>
    %c0_i32_25 = arith.constant 0 : i32
    %55 = vector.broadcast %c0_i32_25 : i32 to vector<8x128xi32>
    %56 = arith.cmpi eq, %54, %55 : vector<8x128xi32>
    %cst_26 = arith.constant 0.000000e+00 : f32
    %57 = vector.shape_cast %53 : vector<1x128xf32> to vector<1x128xf32>
    %58 = vector.broadcast %57 : vector<1x128xf32> to vector<8x128xf32>
    %59 = vector.broadcast %cst_26 : f32 to vector<8x128xf32>
    %60 = arith.select %56, %58, %59 : vector<8x128xi1>, vector<8x128xf32>
    %c0_27 = arith.constant 0 : index
    %c0_28 = arith.constant 0 : index
    %c0_29 = arith.constant 0 : index
    %c0_30 = arith.constant 0 : index
    %61 = vector.load %arg5[%c0_27, %c0_28, %c0_29, %c0_30] : memref<1x1x8x128xf32, #tpu.memory_space<vmem>>, vector<1x1x8x128xf32>
    %62 = vector.shape_cast %61 : vector<1x1x8x128xf32> to vector<8x128xf32>
    %63 = vector.shape_cast %60 : vector<8x128xf32> to vector<1x1x8x128xf32>
    tpu.vector_store %arg5[%c0_27, %c0_28, %c0_29, %c0_30], %63 {strides = array<i32>} : memref<1x1x8x128xf32, #tpu.memory_space<vmem>>, vector<1x1x8x128xf32>,
    return
  }
  func.func @transform_0(%arg0: i32, %arg1: i32) -> (i32, i32, i32, i32) {
    %c0_i32 = arith.constant 0 : i32
    %c0_i32_0 = arith.constant 0 : i32
    %c0_i32_1 = arith.constant 0 : i32
    return %arg0, %c0_i32, %arg1, %c0_i32_0 : i32, i32, i32, i32
  }
  func.func @transform_1(%arg0: i32, %arg1: i32) -> (i32, i32, i32, i32) {
    %c0_i32 = arith.constant 0 : i32
    %c0_i32_0 = arith.constant 0 : i32
    %c0_i32_1 = arith.constant 0 : i32
    return %arg0, %c0_i32, %arg1, %c0_i32_0 : i32, i32, i32, i32
  }
  func.func @transform_2(%arg0: i32, %arg1: i32) -> i32 {
    %c0_i32 = arith.constant 0 : i32
    %c0_i32_0 = arith.constant 0 : i32
    return %c0_i32 : i32
  }
  func.func @transform_3(%arg0: i32, %arg1: i32) -> (i32, i32, i32, i32) {
    %c0_i32 = arith.constant 0 : i32
    %c0_i32_0 = arith.constant 0 : i32
    %c0_i32_1 = arith.constant 0 : i32
    return %arg0, %arg1, %c0_i32, %c0_i32_0 : i32, i32, i32, i32
  }
}

</mosaic_0001>

<llo_original>
// kernel: tpu_custom_call.1
$region0: #{tpu_custom_call.1}
  #allocation0 [shape = 'u32[]', space=smem, size = 0x4, offset = 0x4, fixed_abs, tag = 'smem constant byte address 0x4 - core index']
  #allocation1 [shape = 'u32[144,128]{1,0:T(1,128)}', space=vmem, size = 0x12000, scoped, tag = 'internal scratch']
  %s0 = inlined_call_operand.hbm [shape: f32[2,4,2,128], index: 0, kind: input, shape index: {}]
  %s1 = inlined_call_operand.hbm [shape: s32[2,1,2,128], index: 1, kind: input, shape index: {}]
  %s2 = inlined_call_operand.vmem [shape: f32[4], index: 2, kind: input, shape index: {}]
  %s3 = inlined_call_operand.hbm [shape: f32[2,1,8,128], index: 3, kind: output, shape index: {}]
  %s4 = sld [smem:[#allocation0]]
  $region57: #{tpu_custom_call.1} parent=0
    _
  %s6 = ssub.s32 1, %s4
  %s7 = scalar_select 0, %s6, %s4
  $region1: #{tpu_custom_call.1} parent=0
    #allocation2 [shape = 'u8[8192]{0}', space=vmem, size = 0x2000, scoped, tag = 'input window, operand 0']
    #allocation3 [shape = 's32[2]{0}', space=sflag, size = 0x8, scoped, tag = 'scoped memory for tpu_custom_call.1']
    #allocation4 [shape = 's32[2]{0}', space=sflag, size = 0x8, scoped, tag = 'scoped memory for tpu_custom_call.1']
    #allocation5 [shape = 's32[2]{0}', space=sflag, size = 0x8, scoped, tag = 'scoped memory for tpu_custom_call.1']
    #allocation6 [shape = 'u8[2048]{0}', space=vmem, size = 0x800, scoped, tag = 'input window, operand 1']
    #allocation7 [shape = 's32[2]{0}', space=sflag, size = 0x8, scoped, tag = 'scoped memory for tpu_custom_call.1']
    #allocation8 [shape = 'u8[512]{0}', space=smem, size = 0x200, scoped, tag = 'input window, operand 2, single buffered']
    #allocation9 [shape = 'u8[8192]{0}', space=vmem, size = 0x2000, scoped, tag = 'output window, operand 0']
    %8 = vsyncpa [#allocation3], 0
    %s9 = scalar_lea.sflag [#allocation3], 1
    %10 = vsyncpa %s9, 0
    %11 = vsyncpa [#allocation7], 0
    %s12 = scalar_lea.sflag [#allocation7], 1
    %13 = vsyncpa %s12, 0
    %14 = vsyncpa [#allocation5], 0
    %15 = vsyncpa [#allocation4], 0
    %s16 = scalar_lea.sflag [#allocation4], 1
    %17 = vsyncpa %s16, 0
    loop: start=0, step=1, limit=4
    $region2: #{tpu_custom_call.1} parent=1 // loop_pre_header
      _
    $region3: #{tpu_custom_call.1} parent=1 // loop_header
      %s19 = sphi 0, %s23
      %p20 = scmp.ge.s32.totalorder %s19, 4
      %s26 = sphi 0, %s38
      %s27 = sphi 0, %s34
      %s28 = sphi 0, %s26
      %s29 = sphi 0, %s27
      %s30 = sphi 0, %s28
      %s31 = sphi 0, %s29
      %s43 = sphi 0, %s45
      %s46 = sphi 0, %s43
      %s47 = sphi 0, %s46
      %s63 = sphi 0, %s47
      %s71 = sphi 0, %s73
      %s74 = sphi 0, %s71
      %s75 = sphi 0, %s74
      %s91 = sphi 0, %s75
      %s95 = sphi 0, %s95
      %s97 = sphi 0, %s95
      %s98 = sphi 0, %s97
      %s112 = sphi 0, %s98
      %s120 = sphi 0, %s122
      %s123 = sphi 0, %s120
      %s124 = sphi 0, %s123
      %s140 = sphi 0, %s124
    $region4: #{tpu_custom_call.1} parent=1 // loop_header_branch
      %22 = sbr.rel (%p20) target = $region8
    $region5: #{tpu_custom_call.1} parent=1 // loop_body
      %s24 = ssub.s32 %s19, 1
      %s25 = ssub.s32 %s19, 2
      %s32 = sadd.s32 1, %s27
      %p33 = scmp.ge.s32.totalorder %s32, 1
      %s34 = scalar_select %p33, 0, %s32
      %s35 = sadd.s32 1, %s26
      %s36 = scalar_select %p33, %s35, %s26
      %p37 = scmp.ge.s32.totalorder %s36, 2
      %s38 = scalar_select %p37, 0, %s36
      %s39 = ssub.s32 %s26, %s38
      %s40 = ssub.s32 %s27, %s34
      %s41 = sor.u32 %s39, %s40
      %p42 = scmp.eq.s32.totalorder %s41, 0
      %s44 = sadd.s32 %s43, 1
      %s45 = scalar_select %p42, %s43, %s44
      %p48 = pneg %p42
      %p49 = scmp.eq.s32.totalorder %s19, 1
      %p50 = por %p48, %p49
      %p51 = scmp.ne.s32.totalorder %s43, %s46
      %p52 = scmp.eq.s32.totalorder %s19, 0
      %p53 = por %p51, %p52
      %p54 = scmp.ne.s32.totalorder %s43, %s46
      %p55 = scmp.eq.s32.totalorder %s24, 1
      %p56 = por %p54, %p55
      %p57 = scmp.ne.s32.totalorder %s46, %s47
      %p58 = scmp.eq.s32.totalorder %s24, 0
      %p59 = por %p57, %p58
      %p60 = scmp.ne.s32.totalorder %s46, %s47
      %p61 = scmp.eq.s32.totalorder %s25, 1
      %p62 = por %p60, %p61
      %p64 = scmp.ne.s32.totalorder %s47, %s63
      %p65 = scmp.eq.s32.totalorder %s25, 0
      %p66 = por %p64, %p65
      %s67 = ssub.s32 %s26, %s38
      %s68 = ssub.s32 %s27, %s34
      %s69 = sor.u32 %s67, %s68
      %p70 = scmp.eq.s32.totalorder %s69, 0
      %s72 = sadd.s32 %s71, 1
      %s73 = scalar_select %p70, %s71, %s72
      %p76 = pneg %p70
      %p77 = scmp.eq.s32.totalorder %s19, 1
      %p78 = por %p76, %p77
      %p79 = scmp.ne.s32.totalorder %s71, %s74
      %p80 = scmp.eq.s32.totalorder %s19, 0
      %p81 = por %p79, %p80
      %p82 = scmp.ne.s32.totalorder %s71, %s74
      %p83 = scmp.eq.s32.totalorder %s24, 1
      %p84 = por %p82, %p83
      %p85 = scmp.ne.s32.totalorder %s74, %s75
      %p86 = scmp.eq.s32.totalorder %s24, 0
      %p87 = por %p85, %p86
      %p88 = scmp.ne.s32.totalorder %s74, %s75
      %p89 = scmp.eq.s32.totalorder %s25, 1
      %p90 = por %p88, %p89
      %p92 = scmp.ne.s32.totalorder %s75, %s91
      %p93 = scmp.eq.s32.totalorder %s25, 0
      %p94 = por %p92, %p93
      %s96 = sadd.s32 %s95, 1
      %p99 = scmp.eq.s32.totalorder %s19, 1
      %p100 = scmp.ne.s32.totalorder %s95, %s97
      %p101 = scmp.eq.s32.totalorder %s19, 0
      %p102 = por %p100, %p101
      %p103 = scmp.ne.s32.totalorder %s95, %s97
      %p104 = scmp.eq.s32.totalorder %s24, 1
      %p105 = por %p103, %p104
      %p106 = scmp.ne.s32.totalorder %s97, %s98
      %p107 = scmp.eq.s32.totalorder %s24, 0
      %p108 = por %p106, %p107
      %p109 = scmp.ne.s32.totalorder %s97, %s98
      %p110 = scmp.eq.s32.totalorder %s25, 1
      %p111 = por %p109, %p110
      %p113 = scmp.ne.s32.totalorder %s98, %s112
      %p114 = scmp.eq.s32.totalorder %s25, 0
      %p115 = por %p113, %p114
      %s116 = ssub.s32 %s26, %s38
      %s117 = ssub.s32 %s27, %s34
      %s118 = sor.u32 %s116, %s117
      %p119 = scmp.eq.s32.totalorder %s118, 0
      %s121 = sadd.s32 %s120, 1
      %s122 = scalar_select %p119, %s120, %s121
      %p125 = pneg %p119
      %p126 = scmp.eq.s32.totalorder %s19, 1
      %p127 = por %p125, %p126
      %p128 = scmp.ne.s32.totalorder %s120, %s123
      %p129 = scmp.eq.s32.totalorder %s19, 0
      %p130 = por %p128, %p129
      %p131 = scmp.ne.s32.totalorder %s120, %s123
      %p132 = scmp.eq.s32.totalorder %s24, 1
      %p133 = por %p131, %p132
      %p134 = scmp.ne.s32.totalorder %s123, %s124
      %p135 = scmp.eq.s32.totalorder %s24, 0
      %p136 = por %p134, %p135
      %p137 = scmp.ne.s32.totalorder %s123, %s124
      %p138 = scmp.eq.s32.totalorder %s25, 1
      %p139 = por %p137, %p138
      %p141 = scmp.ne.s32.totalorder %s124, %s140
      %p142 = scmp.eq.s32.totalorder %s25, 0
      %p143 = por %p141, %p142
      %p144 = scmp.le.s32.totalorder 1, %s19
      %p145 = scmp.lt.s32.totalorder %s19, 3
      %p146 = pnand %p144, %p145
      %p147 = pneg %p146
      // Predicated region
      $region9: #{tpu_custom_call.1} parent=5 // pred_check
        _
      $region10: #{tpu_custom_call.1} parent=5 // pred_check_branch
        %149 = sbr.rel (%p146) target = $region12
      $region11: #{tpu_custom_call.1} parent=5 // pred_region
        %s150 = ssub.s32 %s19, 1
        // Predicated region
        $region13: #{tpu_custom_call.1} parent=11 // pred_check
          %p151 = pneg %p108
        $region14: #{tpu_custom_call.1} parent=11 // pred_check_branch
          %153 = sbr.rel (%p151) target = $region16
        $region15: #{tpu_custom_call.1} parent=11 // pred_region
          %s155 = ssub.s32 16, 16
          %156 = vsyncadd [#allocation5], %s155
          %s158 = sshll.u32 %s2, 4
          %s159 = int_to_ptr.vmem [resolvable:$true] %s158
          %161 = dma.vmem_to_smem %s159, 16, [#allocation8], [#allocation5]
        $region16: #{tpu_custom_call.1} parent=11 // pred_fallthru
          _
      $region12: #{tpu_custom_call.1} parent=5 // pred_fallthru
        _
      %p162 = scmp.lt.s32.totalorder %s19, 2
      // Predicated region
      $region17: #{tpu_custom_call.1} parent=5 // pred_check
        %p163 = pneg %p162
      $region18: #{tpu_custom_call.1} parent=5 // pred_check_branch
        %165 = sbr.rel (%p163) target = $region20
      $region19: #{tpu_custom_call.1} parent=5 // pred_region
        // Predicated region
        $region21: #{tpu_custom_call.1} parent=19 // pred_check
          %p166 = pneg %p53
        $region22: #{tpu_custom_call.1} parent=19 // pred_check_branch
          %168 = sbr.rel (%p166) target = $region24
        $region23: #{tpu_custom_call.1} parent=19 // pred_region
          %s169 = sand.u32 %s43, 1
          %s170 = scalar_lea.sflag [#allocation3], %s169
          %s171 = sand.u32 %s43, 1
          %s172 = smul.addr %s171, 8
          %s173 = scalar_lea.vmem [#allocation2], %s172
          %s175 = ssub.s32 128, 128
          %176 = vsyncadd %s170, %s175
          %s177 = smul.addr %s26, 4
          %s178 = sadd.s32 %s27, %s177
          %s179 = smul.addr %s178, 32
          %s180 = scalar_lea.hbm %s0, %s179
          %s181 = sshll.u32 %s173, 4
          %s182 = int_to_ptr.vmem [resolvable:$true] %s181
          %187 = dma.hbm_to_vmem [thread:$0]  %s180, 128, %s182, %s170, 32, 32, 2
        $region24: #{tpu_custom_call.1} parent=19 // pred_fallthru
          _
        // Predicated region
        $region25: #{tpu_custom_call.1} parent=19 // pred_check
          %p188 = pneg %p81
        $region26: #{tpu_custom_call.1} parent=19 // pred_check_branch
          %190 = sbr.rel (%p188) target = $region28
        $region27: #{tpu_custom_call.1} parent=19 // pred_region
          %s191 = sand.u32 %s71, 1
          %s192 = scalar_lea.sflag [#allocation7], %s191
          %s193 = sand.u32 %s71, 1
          %s194 = smul.addr %s193, 2
          %s195 = scalar_lea.vmem [#allocation6], %s194
          %s197 = ssub.s32 32, 32
          %198 = vsyncadd %s192, %s197
          %s199 = sadd.s32 %s27, %s26
          %s200 = smul.addr %s199, 32
          %s201 = scalar_lea.hbm %s1, %s200
          %s203 = sshll.u32 %s195, 4
          %s204 = int_to_ptr.vmem [resolvable:$true] %s203
          %206 = dma.hbm_to_vmem [thread:$0]  %s201, 32, %s204, %s192
        $region28: #{tpu_custom_call.1} parent=19 // pred_fallthru
          _
      $region20: #{tpu_custom_call.1} parent=5 // pred_fallthru
        _
      %p207 = scmp.le.s32.totalorder 1, %s19
      %p208 = scmp.lt.s32.totalorder %s19, 3
      %p209 = pnand %p207, %p208
      %p210 = pneg %p209
      // Predicated region
      $region29: #{tpu_custom_call.1} parent=5 // pred_check
        _
      $region30: #{tpu_custom_call.1} parent=5 // pred_check_branch
        %212 = sbr.rel (%p209) target = $region32
      $region31: #{tpu_custom_call.1} parent=5 // pred_region
        %s213 = ssub.s32 %s19, 1
        %s214 = sand.u32 %s46, 1
        %s215 = scalar_lea.sflag [#allocation3], %s214
        %s216 = sand.u32 %s46, 1
        %s217 = smul.addr %s216, 8
        %s218 = scalar_lea.vmem [#allocation2], %s217
        // Predicated region
        $region33: #{tpu_custom_call.1} parent=31 // pred_check
          %p219 = pneg %p59
        $region34: #{tpu_custom_call.1} parent=31 // pred_check_branch
          %221 = sbr.rel (%p219) target = $region36
        $region35: #{tpu_custom_call.1} parent=31 // pred_region
          %222 = dma.done %s215, 128
        $region36: #{tpu_custom_call.1} parent=31 // pred_fallthru
          _
        %s223 = sand.u32 %s74, 1
        %s224 = scalar_lea.sflag [#allocation7], %s223
        %s225 = sand.u32 %s74, 1
        %s226 = smul.addr %s225, 2
        %s227 = scalar_lea.vmem [#allocation6], %s226
        // Predicated region
        $region37: #{tpu_custom_call.1} parent=31 // pred_check
          %p228 = pneg %p87
        $region38: #{tpu_custom_call.1} parent=31 // pred_check_branch
          %230 = sbr.rel (%p228) target = $region40
        $region39: #{tpu_custom_call.1} parent=31 // pred_region
          %231 = dma.done %s224, 32
        $region40: #{tpu_custom_call.1} parent=31 // pred_fallthru
          _
        // Predicated region
        $region41: #{tpu_custom_call.1} parent=31 // pred_check
          %p232 = pneg %p108
        $region42: #{tpu_custom_call.1} parent=31 // pred_check_branch
          %234 = sbr.rel (%p232) target = $region44
        $region43: #{tpu_custom_call.1} parent=31 // pred_region
          %235 = dma.done [#allocation5], 16
        $region44: #{tpu_custom_call.1} parent=31 // pred_fallthru
          _
        %236 = sfence
        %s237 = sand.u32 %s46, 1
        %s238 = scalar_lea.sflag [#allocation3], %s237
        %s239 = sand.u32 %s46, 1
        %s240 = smul.addr %s239, 8
        %s241 = scalar_lea.vmem [#allocation2], %s240
        %p242 = pneg %p59
        %p243 = pneg %p56
        %s244 = sand.u32 %s74, 1
        %s245 = scalar_lea.sflag [#allocation7], %s244
        %s246 = sand.u32 %s74, 1
        %s247 = smul.addr %s246, 2
        %s248 = scalar_lea.vmem [#allocation6], %s247
        %p249 = pneg %p87
        %p250 = pneg %p84
        %p251 = pneg %p108
        %p252 = pneg %p105
        %p253 = pneg %p136
        %p254 = pneg %p133
        %s255 = sand.u32 %s123, 1
        %s256 = scalar_lea.sflag [#allocation4], %s255
        %s257 = sand.u32 %s123, 1
        %s258 = smul.addr %s257, 8
        %s259 = scalar_lea.vmem [#allocation9], %s258
        %v260 = vld [vmem:[%s227] sm:$0x3]
        %vm261 = vcmp.eq.s32.totalorder %v260, 225
        %v262 = vsel %vm261, 0, %v260
        %v263 = vld [vmem:[%s218] sm:$0x3]
        %s264 = sld [smem:[#allocation8]]
        %v265 = vstv %s264
        %s266 = scalar_lea.vmem %s218, 2 [#allocation2]
        %v267 = vld [vmem:[%s266] sm:$0x3]
        %vm268 = vcmp.eq.s32.totalorder %v262, 1
        %v269 = vadd.f32 %v263, %v267
        %v270 = vsel %vm268, %v267, %v263
        %s271 = sld [smem:[#allocation8 + $0x1]]
        %v272 = vstv %s271
        %v273 = vsel %vm268, %v272, %v265
        %s274 = scalar_lea.vmem %s218, 4 [#allocation2]
        %v275 = vld [vmem:[%s274] sm:$0x3]
        %vm276 = vcmp.eq.s32.totalorder %v262, 2
        %v277 = vadd.f32 %v269, %v275
        %v278 = vsel %vm276, %v275, %v270
        %s279 = sld [smem:[#allocation8 + $0x2]]
        %v280 = vstv %s279
        %v281 = vsel %vm276, %v280, %v273
        %s282 = scalar_lea.vmem %s218, 6 [#allocation2]
        %v283 = vld [vmem:[%s282] sm:$0x3]
        %vm284 = vcmp.eq.s32.totalorder %v262, 3
        %v285 = vadd.f32 %v277, %v283
        %v286 = vsel %vm284, %v283, %v278
        %s287 = sld [smem:[#allocation8 + $0x3]]
        %v288 = vstv %s287
        %v289 = vsel %vm284, %v288, %v281
        %v290 = vmul.f32 %v285, 3.3333333e-06
        %v291 = vmul.f32 %v286, 0.99998665
        %v292 = vadd.f32 %v290, %v291
        %v293 = vadd.f32 %v292, 1e-05
        %v294 = vlog2.pop %v293
        %v295 = vmul.f32 %v294, 0.6931472
        %v296 = vsub.f32 1.0, %v293
        %v297 = vmul.f32 %v296, %v296
        %v298 = vsub.f32 0.0, %v289
        %v299 = vmul.f32 %v298, %v297
        %v300 = vmul.f32 %v299, %v295
        %vm301 = vcmask 1041408
        %v302 = vsel %vm301, %v300, 0.0
        %v303 = vrot.slane %v302, 4
        %v304 = vadd.f32 %v302, %v303
        %v305 = vrot.slane %v304, 2
        %v306 = vadd.f32 %v304, %v305
        %v307 = vrot.slane %v306, 1
        %v308 = vadd.f32 %v306, %v307
        %v309 = vlaneseq
        %v310 = vshrl.u32 %v309, 7
        %vm311 = vcmp.eq.s32.totalorder %v310, 0
        %v312 = vsel %vm311, %v308, 0.0
        %313 = vst [vmem:[%s259] sm:$0xff] %v312
        %s314 = sand.u32 %s123, 1
        %s315 = scalar_lea.sflag [#allocation4], %s314
        %s316 = sand.u32 %s123, 1
        %s317 = smul.addr %s316, 8
        %s318 = scalar_lea.vmem [#allocation9], %s317
        // Predicated region
        $region45: #{tpu_custom_call.1} parent=31 // pred_check
          %p319 = pneg %p133
        $region46: #{tpu_custom_call.1} parent=31 // pred_check_branch
          %321 = sbr.rel (%p319) target = $region48
        $region47: #{tpu_custom_call.1} parent=31 // pred_region
          %s323 = ssub.s32 128, 128
          %324 = vsyncadd %s315, %s323
          %s325 = sadd.s32 %s29, %s28
          %s326 = smul.addr %s325, 128
          %s327 = scalar_lea.hbm %s3, %s326
          %s329 = sshll.u32 %s318, 4
          %s330 = int_to_ptr.vmem [resolvable:$true] %s329
          %332 = dma.vmem_to_hbm [thread:$0]  %s330, 128, %s327, %s315
        $region48: #{tpu_custom_call.1} parent=31 // pred_fallthru
          _
      $region32: #{tpu_custom_call.1} parent=5 // pred_fallthru
        _
      %p333 = scmp.le.s32.totalorder 2, %s19
      // Predicated region
      $region49: #{tpu_custom_call.1} parent=5 // pred_check
        %p334 = pneg %p333
      $region50: #{tpu_custom_call.1} parent=5 // pred_check_branch
        %336 = sbr.rel (%p334) target = $region52
      $region51: #{tpu_custom_call.1} parent=5 // pred_region
        %s337 = ssub.s32 %s19, 2
        // Predicated region
        $region53: #{tpu_custom_call.1} parent=51 // pred_check
          %p338 = pneg %p139
        $region54: #{tpu_custom_call.1} parent=51 // pred_check_branch
          %340 = sbr.rel (%p338) target = $region56
        $region55: #{tpu_custom_call.1} parent=51 // pred_region
          %s341 = sand.u32 %s124, 1
          %s342 = scalar_lea.sflag [#allocation4], %s341
          %s343 = sand.u32 %s124, 1
          %s344 = smul.addr %s343, 8
          %s345 = scalar_lea.vmem [#allocation9], %s344
          %346 = dma.done %s342, 128
        $region56: #{tpu_custom_call.1} parent=51 // pred_fallthru
          _
      $region52: #{tpu_custom_call.1} parent=5 // pred_fallthru
        _
    $region6: #{tpu_custom_call.1} parent=1 // loop_footer
      %s23 = sadd.s32 1, %s19
    $region7: #{tpu_custom_call.1} parent=1 // loop_footer_branch
      %18 = sbr.rel target = $region3
    $region8: #{tpu_custom_call.1} parent=1 // loop_exit
      _
    %347 = vsyncpa [#allocation3], 1
    %s348 = scalar_lea.sflag [#allocation3], 1
    %349 = vsyncpa %s348, 1
    %350 = vsyncpa [#allocation7], 1
    %s351 = scalar_lea.sflag [#allocation7], 1
    %352 = vsyncpa %s351, 1
    %353 = vsyncpa [#allocation4], 1
    %s354 = scalar_lea.sflag [#allocation4], 1
    %355 = vsyncpa %s354, 1
    %356 = vsyncpa [#allocation5], 1
    %s357 = scalar_lea.sflag [#allocation5], 1
    %358 = vsyncpa %s357, 1

</llo_original>
